<compile_context>
chip_gen: v7x
topology: tpu7x:2x2x1
jax: 0.10.0
libtpu: 0.0.40
codegen_flags: <defaults>
</compile_context>

<pallas_src>
import jax
import jax.numpy as jnp
from jax.experimental import pallas as pl
from jax.experimental.pallas import tpu as pltpu


# ----------------------------- Pallas kernel -------------------------------

def _conv_bn_silu_kernel(xs_ref, w_ref, b_ref, o_ref):
    # xs_ref: (1, TILE_HW, K*K*C1) bf16  -- im2col taps, contraction-dim packed
    # w_ref : (K*K*C1, C2p)        bf16  -- BN-folded weights, C2 padded to 128
    # b_ref : (1, C2p)             f32   -- BN-folded bias
    # o_ref : (1, TILE_HW, C2p)    f32
    acc = jnp.dot(xs_ref[0], w_ref[...], preferred_element_type=jnp.float32)
    y = acc + b_ref[...]
    # SiLU in f32: y * sigmoid(y).  (exp goes to the EUP; the divide could be
    # replaced by pl.reciprocal(..., approx=True) at slightly lower accuracy.)
    o_ref[0, :, :] = (y * (1.0 / (1.0 + jnp.exp(-y)))).astype(o_ref.dtype)


# ----------------------------- wrapper (glue) -------------------------------

def conv_bn_silu_forward(x, w_fused, b_fused, *, tile_hw=None):
    """Fused Conv->BN->SiLU forward.

    x       : (N, C1, H, W) float32 NCHW (PyTorch layout).
    w_fused : (C2, C1, K, K) float32 OIHW, BN already folded in.
    b_fused : (C2,) float32 BN-folded bias.
    Covers the module defaults: stride=1, groups=1, dilation=1, p=autopad=k//2.
    """
    N, C1, H, W = x.shape
    C2, C1w, K, K2 = w_fused.shape
    assert C1w == C1 and K == K2 and K % 2 == 1
    pad = K // 2
    HW = H * W
    KKC1 = K * K * C1

    LANE = 128
    C2p = ((C2 + LANE - 1) // LANE) * LANE          # lane-dense output channels

    if tile_hw is None:
        # >= 2 spatial tiles per image when possible (pipelining + v7x
        # megacore), multiple of 8 sublanes, capped for a modest VMEM footprint.
        tile_hw = 512 if HW >= 1024 else max(8, ((HW + 1) // 2 + 7) // 8 * 8)
    n_tiles = -(-HW // tile_hw)
    HWp = n_tiles * tile_hw

    # ---- plain-JAX glue (outside the kernel) -------------------------------
    # NCHW -> NHWC once, pad spatially, pack the k*k taps into the contraction
    # dim, cast to bf16 (f32 accumulation happens inside the kernel).
    # TODO(synk): if the surrounding model is NHWC, both transposes can go.
    x_nhwc = jnp.transpose(x, (0, 2, 3, 1)).astype(jnp.bfloat16)
    xp = jnp.pad(x_nhwc, ((0, 0), (pad, pad), (pad, pad), (0, 0)))
    taps = [xp[:, dy:dy + H, dx:dx + W, :] for dy in range(K) for dx in range(K)]
    xs = jnp.concatenate(taps, axis=-1).reshape(N, HW, KKC1)
    if HWp != HW:
        xs = jnp.pad(xs, ((0, 0), (0, HWp - HW), (0, 0)))

    # (O,I,kh,kw) -> tap-major (kh*kw*I, O); pad O to a multiple of 128.
    w_mat = jnp.transpose(w_fused, (2, 3, 1, 0)).reshape(KKC1, C2)
    w_mat = jnp.pad(w_mat, ((0, 0), (0, C2p - C2))).astype(jnp.bfloat16)
    b2d = jnp.pad(b_fused, (0, C2p - C2)).reshape(1, C2p).astype(jnp.float32)

    # VMEM budget: double-buffered in/out blocks + resident weights/bias + acc.
    blk_in = tile_hw * KKC1 * 2
    blk_out = tile_hw * C2p * 4
    need = 2 * (blk_in + blk_out) + 2 * (KKC1 * C2p * 2 + C2p * 4) + blk_out
    vmem_limit = int(min(max(2 * need, 16 * 2 ** 20), 48 * 2 ** 20))

    out = pl.pallas_call(
        _conv_bn_silu_kernel,
        out_shape=jax.ShapeDtypeStruct((N, HWp, C2p), jnp.float32),
        grid_spec=pltpu.PrefetchScalarGridSpec(
            num_scalar_prefetch=0,
            grid=(N, n_tiles),
            in_specs=[
                pl.BlockSpec((1, tile_hw, KKC1), lambda n, t: (n, t, 0)),
                pl.BlockSpec((KKC1, C2p), lambda n, t: (0, 0)),
                pl.BlockSpec((1, C2p), lambda n, t: (0, 0)),
            ],
            out_specs=pl.BlockSpec((1, tile_hw, C2p), lambda n, t: (n, t, 0)),
        ),
        compiler_params=pltpu.CompilerParams(
            dimension_semantics=("parallel", "parallel"),
            vmem_limit_bytes=vmem_limit),
    )(xs, w_mat, b2d)

    out = out[:, :HW, :C2].reshape(N, H, W, C2)
    return jnp.transpose(out, (0, 3, 1, 2)).astype(x.dtype)     # back to NCHW


# --------------------- deterministic parameter setup ------------------------

def init_conv_params(key, c1, c2, k, eps=1e-5):
    kw, kbn = jax.random.split(key)
    w = jax.random.normal(kw, (c2, c1, k, k), jnp.float32) * 0.1  # OIHW, no bias
    ks = jax.random.split(kbn, 4)
    gamma = jax.random.uniform(ks[0], (c2,), minval=0.5, maxval=1.5)
    beta = jax.random.normal(ks[1], (c2,)) * 0.1
    mean = jax.random.normal(ks[2], (c2,)) * 0.1
    var = jax.random.uniform(ks[3], (c2,), minval=0.5, maxval=1.5)
    return w, (gamma, beta, mean, var), eps


def fuse_conv_bn(w, bn, eps):
    # eval-mode BN folded into the conv (same math as ultralytics fuse_conv_and_bn)
    gamma, beta, mean, var = bn
    s = gamma / jnp.sqrt(var + eps)
    return w * s[:, None, None, None], beta - mean * s


# ------------------------------- references ---------------------------------

def conv_bn_silu_reference(x, w, bn, eps):
    """Full-f32 reference of the module: SiLU(BN(conv(x)))."""
    gamma, beta, mean, var = bn
    k = w.shape[-1]
    p = k // 2
    y = jax.lax.conv_general_dilated(
        x, w, (1, 1), ((p, p), (p, p)),
        dimension_numbers=('NCHW', 'OIHW', 'NCHW'))
    s = gamma / jnp.sqrt(var + eps)
    y = y * s[None, :, None, None] + (beta - mean * s)[None, :, None, None]
    return y * jax.nn.sigmoid(y)                                  # SiLU


def conv_bn_silu_reference_bf16(x, w_fused, b_fused):
    """Reference of the kernel's exact math: bf16 inputs/weights, f32 accum."""
    k = w_fused.shape[-1]
    p = k // 2
    xq = x.astype(jnp.bfloat16).astype(jnp.float32)
    wq = w_fused.astype(jnp.bfloat16).astype(jnp.float32)
    y = jax.lax.conv_general_dilated(
        xq, wq, (1, 1), ((p, p), (p, p)),
        dimension_numbers=('NCHW', 'OIHW', 'NCHW'))
    y = y + b_fused[None, :, None, None]
    return y * jax.nn.sigmoid(y)


# --------------------------------- main -------------------------------------

if __name__ == "__main__":
    N, C1, C2, H, W = 2, 4, 8, 16, 16
    key = jax.random.PRNGKey(0)
    kx, kp3, kp1 = jax.random.split(key, 3)
    x = jax.random.normal(kx, (N, C1, H, W), jnp.float32)

    # k=3 (typical YOLO usage) and k=1 (the module's default constructor arg).
    for k, kp in ((3, kp3), (1, kp1)):
        w, bn, eps = init_conv_params(kp, C1, C2, k)
        w_f, b_f = fuse_conv_bn(w, bn, eps)

        out = jax.block_until_ready(conv_bn_silu_forward(x, w_f, b_f))
        assert out.shape == (N, C2, H, W)

        ref_q = conv_bn_silu_reference_bf16(x, w_f, b_f)   # kernel-math reference
        ref = conv_bn_silu_reference(x, w, bn, eps)        # full-f32 module reference
        err_q = float(jnp.max(jnp.abs(out - ref_q)))
        err = float(jnp.max(jnp.abs(out - ref)))
        assert jnp.allclose(out, ref_q, atol=2e-3, rtol=2e-3), (k, err_q)
        assert jnp.allclose(out, ref, atol=1e-2, rtol=1e-2), (k, err)

    print("KERNEL_OK")
</pallas_src>

<mosaic_0001>
module attributes {stable_mosaic.version = 11 : i64} {
  func.func @_conv_bn_silu_kernel(%arg0: i32, %arg1: i32, %arg2: memref<1x128x36xbf16, #tpu.memory_space<vmem>>, %arg3: memref<36x128xbf16, #tpu.memory_space<vmem>>, %arg4: memref<1x128xf32, #tpu.memory_space<vmem>>, %arg5: memref<1x128x128xf32, #tpu.memory_space<vmem>>) attributes {dimension_semantics = [#tpu.dimension_semantics<parallel>, #tpu.dimension_semantics<parallel>], iteration_bounds = array<i64: 2, 2>, scalar_prefetch = 0 : i64, scratch_operands = 0 : i64, tpu.core_type = #tpu.core_type<tc>, window_params = [{transform_indices = @transform_0, window_bounds = array<i64: 1, 128, 36>}, {pipeline_mode = #tpu.pipeline_mode<synchronous>, transform_indices = @transform_1, window_bounds = array<i64: 36, 128>}, {pipeline_mode = #tpu.pipeline_mode<synchronous>, transform_indices = @transform_2, window_bounds = array<i64: 1, 128>}, {transform_indices = @transform_3, window_bounds = array<i64: 1, 128, 128>}]} {
    %c0 = arith.constant 0 : index
    %c0_0 = arith.constant 0 : index
    %c0_1 = arith.constant 0 : index
    %0 = vector.load %arg2[%c0, %c0_0, %c0_1] : memref<1x128x36xbf16, #tpu.memory_space<vmem>>, vector<1x128x36xbf16>
    %1 = vector.shape_cast %0 : vector<1x128x36xbf16> to vector<128x36xbf16>
    %c0_2 = arith.constant 0 : index
    %c0_3 = arith.constant 0 : index
    %2 = vector.load %arg3[%c0_2, %c0_3] : memref<36x128xbf16, #tpu.memory_space<vmem>>, vector<36x128xbf16>
    %cst = arith.constant dense<0.000000e+00> : vector<128x128xf32>
    %3 = tpu.matmul %1, %2, %cst {dimension_numbers = #tpu.dot_dimension_numbers<[1], [0], [0], [1], [0, 0, 1, 1], [], []>} : vector<128x36xbf16>, vector<36x128xbf16>, vector<128x128xf32> -> vector<128x128xf32>
    %c0_4 = arith.constant 0 : index
    %c0_5 = arith.constant 0 : index
    %4 = vector.load %arg4[%c0_4, %c0_5] : memref<1x128xf32, #tpu.memory_space<vmem>>, vector<1x128xf32>
    %5 = vector.broadcast %4 : vector<1x128xf32> to vector<128x128xf32>
    %6 = arith.addf %3, %5 : vector<128x128xf32>
    %cst_6 = arith.constant 0.000000e+00 : f32
    %7 = vector.broadcast %cst_6 : f32 to vector<128x128xf32>
    %8 = arith.subf %7, %6 : vector<128x128xf32>
    %9 = math.exp %8 : vector<128x128xf32>
    %cst_7 = arith.constant 1.000000e+00 : f32
    %10 = vector.broadcast %cst_7 : f32 to vector<128x128xf32>
    %11 = arith.addf %10, %9 : vector<128x128xf32>
    %cst_8 = arith.constant 1.000000e+00 : f32
    %12 = vector.broadcast %cst_8 : f32 to vector<128x128xf32>
    %13 = arith.divf %12, %11 : vector<128x128xf32>
    %14 = arith.mulf %6, %13 : vector<128x128xf32>
    %c0_9 = arith.constant 0 : index
    %c0_10 = arith.constant 0 : index
    %c0_11 = arith.constant 0 : index
    %15 = vector.load %arg5[%c0_9, %c0_10, %c0_11] : memref<1x128x128xf32, #tpu.memory_space<vmem>>, vector<1x128x128xf32>
    %16 = vector.shape_cast %15 : vector<1x128x128xf32> to vector<128x128xf32>
    %17 = vector.shape_cast %14 : vector<128x128xf32> to vector<1x128x128xf32>
    tpu.vector_store %arg5[%c0_9, %c0_10, %c0_11], %17 {strides = array<i32>} : memref<1x128x128xf32, #tpu.memory_space<vmem>>, vector<1x128x128xf32>,
    return
  }
  func.func @transform_0(%arg0: i32, %arg1: i32) -> (i32, i32, i32) {
    %c0_i32 = arith.constant 0 : i32
    %c0_i32_0 = arith.constant 0 : i32
    return %arg0, %arg1, %c0_i32 : i32, i32, i32
  }
  func.func @transform_1(%arg0: i32, %arg1: i32) -> (i32, i32) {
    %c0_i32 = arith.constant 0 : i32
    %c0_i32_0 = arith.constant 0 : i32
    %c0_i32_1 = arith.constant 0 : i32
    return %c0_i32, %c0_i32_0 : i32, i32
  }
  func.func @transform_2(%arg0: i32, %arg1: i32) -> (i32, i32) {
    %c0_i32 = arith.constant 0 : i32
    %c0_i32_0 = arith.constant 0 : i32
    %c0_i32_1 = arith.constant 0 : i32
    return %c0_i32, %c0_i32_0 : i32, i32
  }
  func.func @transform_3(%arg0: i32, %arg1: i32) -> (i32, i32, i32) {
    %c0_i32 = arith.constant 0 : i32
    %c0_i32_0 = arith.constant 0 : i32
    return %arg0, %arg1, %c0_i32 : i32, i32, i32
  }
}

</mosaic_0001>

<llo_original>
// kernel: tpu_custom_call.1
$region0: #{tpu_custom_call.1}
  #allocation0 [shape = 'u32[]', space=smem, size = 0x4, offset = 0x4, fixed_abs, tag = 'smem constant byte address 0x4 - core index']
  #allocation1 [shape = 'u32[144,128]{1,0:T(1,128)}', space=vmem, size = 0x12000, scoped, tag = 'internal scratch']
  %s0 = inlined_call_operand.vmem [shape: bf16[2,256,36], index: 0, kind: input, shape index: {}]
  %s1 = inlined_call_operand.vmem [shape: bf16[36,128], index: 1, kind: input, shape index: {}]
  %s2 = inlined_call_operand.vmem [shape: f32[1,128], index: 2, kind: input, shape index: {}]
  %s3 = inlined_call_operand.hbm [shape: f32[2,256,128], index: 3, kind: output, shape index: {}]
  %s4 = sld [smem:[#allocation0]]
  $region45: #{tpu_custom_call.1} parent=0
    _
  %s6 = ssub.s32 1, %s4
  %s7 = scalar_select 0, %s6, %s4
  $region1: #{tpu_custom_call.1} parent=0
    #allocation2 [shape = 'u8[131072]{0}', space=vmem, size = 0x20000, scoped, tag = 'output window, operand 0']
    #allocation3 [shape = 's32[2]{0}', space=sflag, size = 0x8, scoped, tag = 'scoped memory for tpu_custom_call.1']
    %8 = vsyncpa [#allocation3], 0
    %s9 = scalar_lea.sflag [#allocation3], 1
    %10 = vsyncpa %s9, 0
    loop: start=0, step=1, limit=6
    $region2: #{tpu_custom_call.1} parent=1 // loop_pre_header
      _
    $region3: #{tpu_custom_call.1} parent=1 // loop_header
      %s12 = sphi 0, %s16
      %p13 = scmp.ge.s32.totalorder %s12, 6
      %s19 = sphi 0, %s31
      %s20 = sphi 0, %s27
      %s21 = sphi 0, %s19
      %s22 = sphi 0, %s20
      %s23 = sphi 0, %s21
      %s24 = sphi 0, %s22
      %s36 = sphi 0, %s38
      %s39 = sphi 0, %s36
      %s40 = sphi 0, %s39
      %s56 = sphi 0, %s40
      %s60 = sphi 0, %s60
      %s62 = sphi 0, %s60
      %s63 = sphi 0, %s62
      %s77 = sphi 0, %s63
      %s81 = sphi 0, %s81
      %s83 = sphi 0, %s81
      %s84 = sphi 0, %s83
      %s98 = sphi 0, %s84
      %s106 = sphi 0, %s108
      %s109 = sphi 0, %s106
      %s110 = sphi 0, %s109
      %s126 = sphi 0, %s110
    $region4: #{tpu_custom_call.1} parent=1 // loop_header_branch
      %15 = sbr.rel (%p13) target = $region8
    $region5: #{tpu_custom_call.1} parent=1 // loop_body
      %s17 = ssub.s32 %s12, 1
      %s18 = ssub.s32 %s12, 2
      %s25 = sadd.s32 1, %s20
      %p26 = scmp.ge.s32.totalorder %s25, 2
      %s27 = scalar_select %p26, 0, %s25
      %s28 = sadd.s32 1, %s19
      %s29 = scalar_select %p26, %s28, %s19
      %p30 = scmp.ge.s32.totalorder %s29, 2
      %s31 = scalar_select %p30, 0, %s29
      %s32 = ssub.s32 %s19, %s31
      %s33 = ssub.s32 %s20, %s27
      %s34 = sor.u32 %s32, %s33
      %p35 = scmp.eq.s32.totalorder %s34, 0
      %s37 = sadd.s32 %s36, 1
      %s38 = scalar_select %p35, %s36, %s37
      %p41 = pneg %p35
      %p42 = scmp.eq.s32.totalorder %s12, 3
      %p43 = por %p41, %p42
      %p44 = scmp.ne.s32.totalorder %s36, %s39
      %p45 = scmp.eq.s32.totalorder %s12, 0
      %p46 = por %p44, %p45
      %p47 = scmp.ne.s32.totalorder %s36, %s39
      %p48 = scmp.eq.s32.totalorder %s17, 3
      %p49 = por %p47, %p48
      %p50 = scmp.ne.s32.totalorder %s39, %s40
      %p51 = scmp.eq.s32.totalorder %s17, 0
      %p52 = por %p50, %p51
      %p53 = scmp.ne.s32.totalorder %s39, %s40
      %p54 = scmp.eq.s32.totalorder %s18, 3
      %p55 = por %p53, %p54
      %p57 = scmp.ne.s32.totalorder %s40, %s56
      %p58 = scmp.eq.s32.totalorder %s18, 0
      %p59 = por %p57, %p58
      %s61 = sadd.s32 %s60, 1
      %p64 = scmp.eq.s32.totalorder %s12, 3
      %p65 = scmp.ne.s32.totalorder %s60, %s62
      %p66 = scmp.eq.s32.totalorder %s12, 0
      %p67 = por %p65, %p66
      %p68 = scmp.ne.s32.totalorder %s60, %s62
      %p69 = scmp.eq.s32.totalorder %s17, 3
      %p70 = por %p68, %p69
      %p71 = scmp.ne.s32.totalorder %s62, %s63
      %p72 = scmp.eq.s32.totalorder %s17, 0
      %p73 = por %p71, %p72
      %p74 = scmp.ne.s32.totalorder %s62, %s63
      %p75 = scmp.eq.s32.totalorder %s18, 3
      %p76 = por %p74, %p75
      %p78 = scmp.ne.s32.totalorder %s63, %s77
      %p79 = scmp.eq.s32.totalorder %s18, 0
      %p80 = por %p78, %p79
      %s82 = sadd.s32 %s81, 1
      %p85 = scmp.eq.s32.totalorder %s12, 3
      %p86 = scmp.ne.s32.totalorder %s81, %s83
      %p87 = scmp.eq.s32.totalorder %s12, 0
      %p88 = por %p86, %p87
      %p89 = scmp.ne.s32.totalorder %s81, %s83
      %p90 = scmp.eq.s32.totalorder %s17, 3
      %p91 = por %p89, %p90
      %p92 = scmp.ne.s32.totalorder %s83, %s84
      %p93 = scmp.eq.s32.totalorder %s17, 0
      %p94 = por %p92, %p93
      %p95 = scmp.ne.s32.totalorder %s83, %s84
      %p96 = scmp.eq.s32.totalorder %s18, 3
      %p97 = por %p95, %p96
      %p99 = scmp.ne.s32.totalorder %s84, %s98
      %p100 = scmp.eq.s32.totalorder %s18, 0
      %p101 = por %p99, %p100
      %s102 = ssub.s32 %s19, %s31
      %s103 = ssub.s32 %s20, %s27
      %s104 = sor.u32 %s102, %s103
      %p105 = scmp.eq.s32.totalorder %s104, 0
      %s107 = sadd.s32 %s106, 1
      %s108 = scalar_select %p105, %s106, %s107
      %p111 = pneg %p105
      %p112 = scmp.eq.s32.totalorder %s12, 3
      %p113 = por %p111, %p112
      %p114 = scmp.ne.s32.totalorder %s106, %s109
      %p115 = scmp.eq.s32.totalorder %s12, 0
      %p116 = por %p114, %p115
      %p117 = scmp.ne.s32.totalorder %s106, %s109
      %p118 = scmp.eq.s32.totalorder %s17, 3
      %p119 = por %p117, %p118
      %p120 = scmp.ne.s32.totalorder %s109, %s110
      %p121 = scmp.eq.s32.totalorder %s17, 0
      %p122 = por %p120, %p121
      %p123 = scmp.ne.s32.totalorder %s109, %s110
      %p124 = scmp.eq.s32.totalorder %s18, 3
      %p125 = por %p123, %p124
      %p127 = scmp.ne.s32.totalorder %s110, %s126
      %p128 = scmp.eq.s32.totalorder %s18, 0
      %p129 = por %p127, %p128
      %p130 = scmp.le.s32.totalorder 1, %s12
      %p131 = scmp.lt.s32.totalorder %s12, 5
      %p132 = pnand %p130, %p131
      %p133 = pneg %p132
      // Predicated region
      $region9: #{tpu_custom_call.1} parent=5 // pred_check
        _
      $region10: #{tpu_custom_call.1} parent=5 // pred_check_branch
        %135 = sbr.rel (%p132) target = $region12
      $region11: #{tpu_custom_call.1} parent=5 // pred_region
        %s136 = ssub.s32 %s12, 1
        // Predicated region
        $region13: #{tpu_custom_call.1} parent=11 // pred_check
          %p137 = pneg %p73
        $region14: #{tpu_custom_call.1} parent=11 // pred_check_branch
          %139 = sbr.rel (%p137) target = $region16
        $region15: #{tpu_custom_call.1} parent=11 // pred_region
          _
        $region16: #{tpu_custom_call.1} parent=11 // pred_fallthru
          _
        // Predicated region
        $region17: #{tpu_custom_call.1} parent=11 // pred_check
          %p140 = pneg %p94
        $region18: #{tpu_custom_call.1} parent=11 // pred_check_branch
          %142 = sbr.rel (%p140) target = $region20
        $region19: #{tpu_custom_call.1} parent=11 // pred_region
          _
        $region20: #{tpu_custom_call.1} parent=11 // pred_fallthru
          _
      $region12: #{tpu_custom_call.1} parent=5 // pred_fallthru
        _
      %p143 = scmp.lt.s32.totalorder %s12, 4
      // Predicated region
      $region21: #{tpu_custom_call.1} parent=5 // pred_check
        %p144 = pneg %p143
      $region22: #{tpu_custom_call.1} parent=5 // pred_check_branch
        %146 = sbr.rel (%p144) target = $region24
      $region23: #{tpu_custom_call.1} parent=5 // pred_region
        // Predicated region
        $region25: #{tpu_custom_call.1} parent=23 // pred_check
          %p147 = pneg %p46
        $region26: #{tpu_custom_call.1} parent=23 // pred_check_branch
          %149 = sbr.rel (%p147) target = $region28
        $region27: #{tpu_custom_call.1} parent=23 // pred_region
          %s150 = smul.u32 16, %s20
          %p151 = scmp.lt.s32.totalorder %s19, 1
          %s152 = scalar_select %p151, %s19, 1
          %p153 = scmp.lt.s32.totalorder %s150, 31
          %s154 = scalar_select %p153, %s150, 31
          %s155 = smul.addr %s152, 32
          %s156 = sadd.s32 %s154, %s155
          %s157 = smul.addr %s156, 4
          %s158 = scalar_lea.vmem %s0, %s157
          %s159 = smul.u32 16, %s20
        $region28: #{tpu_custom_call.1} parent=23 // pred_fallthru
          _
      $region24: #{tpu_custom_call.1} parent=5 // pred_fallthru
        _
      %p160 = scmp.le.s32.totalorder 1, %s12
      %p161 = scmp.lt.s32.totalorder %s12, 5
      %p162 = pnand %p160, %p161
      %p163 = pneg %p162
      // Predicated region
      $region29: #{tpu_custom_call.1} parent=5 // pred_check
        _
      $region30: #{tpu_custom_call.1} parent=5 // pred_check_branch
        %165 = sbr.rel (%p162) target = $region32
      $region31: #{tpu_custom_call.1} parent=5 // pred_region
        %s166 = ssub.s32 %s12, 1
        %s167 = smul.u32 16, %s22
        %p168 = scmp.lt.s32.totalorder %s21, 1
        %s169 = scalar_select %p168, %s21, 1
        %p170 = scmp.lt.s32.totalorder %s167, 31
        %s171 = scalar_select %p170, %s167, 31
        %s172 = smul.addr %s169, 32
        %s173 = sadd.s32 %s171, %s172
        %s174 = smul.addr %s173, 4
        %s175 = scalar_lea.vmem %s0, %s174
        %p176 = pneg %p52
        %p177 = pneg %p49
        %p178 = pneg %p73
        %p179 = pneg %p70
        %p180 = pneg %p94
        %p181 = pneg %p91
        %p182 = pneg %p122
        %p183 = pneg %p119
        %s184 = sand.u32 %s109, 1
        %s185 = scalar_lea.sflag [#allocation3], %s184
        %s186 = sand.u32 %s109, 1
        %s187 = smul.addr %s186, 128
        %s188 = scalar_lea.vmem [#allocation2], %s187
        %s189 = smul.u32 16, %s22
        %p190 = scmp.lt.s32.totalorder %s21, 1
        %s191 = scalar_select %p190, %s21, 1
        %p192 = scmp.lt.s32.totalorder %s189, 31
        %s193 = scalar_select %p192, %s189, 31
        %s194 = smul.addr %s191, 32
        %s195 = sadd.s32 %s193, %s194
        %s196 = smul.addr %s195, 4
        %s197 = scalar_lea.vmem %s0, %s196
        %s198 = smul.u32 16, %s22
        %s199 = smul.u32 16, %s22
        %v201 = vld [vmem:[%s197] sm:$0xf]
        %v202 = vld [vmem:[%s197 + $0x4] sm:$0xf]
        %v203 = vld [vmem:[%s197 + $0x8] sm:$0xf]
        %v204 = vld [vmem:[%s197 + $0xc] sm:$0xf]
        %v205 = vld [vmem:[%s197 + $0x10] sm:$0xf]
        %v206 = vld [vmem:[%s197 + $0x14] sm:$0xf]
        %v207 = vld [vmem:[%s197 + $0x18] sm:$0xf]
        %v208 = vld [vmem:[%s197 + $0x1c] sm:$0xf]
        %v209 = vld [vmem:[%s197 + $0x20] sm:$0xf]
        %v210 = vld [vmem:[%s197 + $0x24] sm:$0xf]
        %v211 = vld [vmem:[%s197 + $0x28] sm:$0xf]
        %v212 = vld [vmem:[%s197 + $0x2c] sm:$0xf]
        %v213 = vld [vmem:[%s197 + $0x30] sm:$0xf]
        %v214 = vld [vmem:[%s197 + $0x34] sm:$0xf]
        %v215 = vld [vmem:[%s197 + $0x38] sm:$0xf]
        %v216 = vld [vmem:[%s197 + $0x3c] sm:$0xf]
        %v217 = vld [vmem:[%s1] sm:$0xf]
        %v218 = vld [vmem:[%s1 + $0x4] sm:$0xf]
        %v219 = vld [vmem:[%s1 + $0x8] sm:$0xf]
        %v220 = vld [vmem:[%s1 + $0xc] sm:$0xf]
        %v221 = vld [vmem:[%s1 + $0x10] sm:$0x3]
        %v222 = vld [vmem:[%s2] sm:$0x1]
        %v224 = vlaneseq
        %v225 = vshrl.u32 %v224, 7
        %v226 = vsub.s32 0, %v225
        %v227 = vrot.slane %v222, %v226
        %v245 = vunpack.c.l.b16 %v201
        %v246 = vunpack.c.l.b16 %v202
        %v247 = vunpack.c.l.b16 %v203
        %v248 = vunpack.c.l.b16 %v204
        %v249 = vunpack.c.l.b16 %v205
        %v250 = vunpack.c.l.b16 %v206
        %v251 = vunpack.c.l.b16 %v207
        %v252 = vunpack.c.l.b16 %v208
        %v253 = vunpack.c.l.b16 %v209
        %v254 = vunpack.c.l.b16 %v210
        %v255 = vunpack.c.l.b16 %v211
        %v256 = vunpack.c.l.b16 %v212
        %v257 = vunpack.c.l.b16 %v213
        %v258 = vunpack.c.l.b16 %v214
        %v259 = vunpack.c.l.b16 %v215
        %v260 = vunpack.c.l.b16 %v216
        %v261 = vpack.c.b16 %v246, %v245
        %v262 = vpack.c.b16 %v248, %v247
        %v263 = vpack.c.b16 %v250, %v249
        %v264 = vpack.c.b16 %v252, %v251
        %v265 = vpack.c.b16 %v254, %v253
        %v266 = vpack.c.b16 %v256, %v255
        %v267 = vpack.c.b16 %v258, %v257
        %v268 = vpack.c.b16 %v260, %v259
        %v274 = vunpack.c.l.b16 %v217
        %v275 = vunpack.c.l.b16 %v218
        %v276 = vunpack.c.l.b16 %v219
        %v277 = vunpack.c.l.b16 %v220
        %v278 = vunpack.c.l.b16 %v221
        %v279 = vpack.c.b16 %v275, %v274
        %v280 = vpack.c.b16 %v277, %v276
        %v281 = vpack.c.b16 %v278, %v278
        %vm284 = vcmask 293888
        %v286 = vsel %vm284, %v261, 0
        %v289 = vsel %vm284, %v262, 0
        %v292 = vsel %vm284, %v263, 0
        %v295 = vsel %vm284, %v264, 0
        %v298 = vsel %vm284, %v265, 0
        %v301 = vsel %vm284, %v266, 0
        %v304 = vsel %vm284, %v267, 0
        %v307 = vsel %vm284, %v268, 0
        %vm309 = vcmask 1041408
        %v311 = vsel %vm309, %v281, 0
        %313 = vmatprep.subr.bf16.mxu0 0
        %314 = vmatpush1.bf16.msra.mxu0 %v279
        %315 = vmatprep.subr.bf16.mxu0 0
        %316 = vmatpush1.bf16.msra.mxu0 %v280
        %317 = vmatprep.subr.bf16.mxu0 0
        %318 = vmatpush1.bf16.msra.mxu0 %v311
        %319 = vmatprep.subr.bf16.mxu0 0
        %320 = vmatpush1.bf16.msra.mxu0 0
        %321 = vmatprep.subr.bf16.mxu0 0
        %322 = vmatpush1.bf16.msra.mxu0 0
        %323 = vmatprep.subr.bf16.mxu0 0
        %324 = vmatpush1.bf16.msra.mxu0 0
        %325 = vmatprep.subr.bf16.mxu0 0
        %326 = vmatpush1.bf16.msra.mxu0 0
        %327 = vmatprep.subr.bf16.mxu0 0
        %328 = vmatpush1.bf16.msra.mxu0 0
        %329 = vmatprep.subr.bf16.mxu0 0
        %330 = vmatpush1.bf16.msra.mxu0 0
        %331 = vmatprep.subr.bf16.mxu0 0
        %332 = vmatpush1.bf16.msra.mxu0 0
        %333 = vmatprep.subr.bf16.mxu0 0
        %334 = vmatpush1.bf16.msra.mxu0 0
        %335 = vmatprep.subr.bf16.mxu0 0
        %336 = vmatpush1.bf16.msra.mxu0 0
        %337 = vmatprep.subr.bf16.mxu0 0
        %338 = vmatpush1.bf16.msra.mxu0 0
        %339 = vmatprep.subr.bf16.mxu0 0
        %340 = vmatpush1.bf16.msra.mxu0 0
        %341 = vmatprep.subr.bf16.mxu0 0
        %342 = vmatpush1.bf16.msra.mxu0 0
        %343 = vmatprep.subr.bf16.mxu0 0
        %344 = vmatpush1.bf16.msra.mxu0 0
        %345 = vmatprep.mubr.bf16.mxu0 0
        %346 = vmatmul.mubr.bf16.gmra.mrb[0].mxu0 %v286
        %v347 = vpop.f32.mrb[0].mxu0
        %v348 = vadd.f32 %v227, %v347
        %v349 = vpop.f32.mrb[0].mxu0
        %v350 = vpop.f32.mrb[0].mxu0
        %v351 = vadd.f32 %v227, %v350
        %v352 = vpop.f32.mrb[0].mxu0
        %353 = vmatprep.mubr.bf16.mxu0 0
        %354 = vmatmul.mubr.bf16.gmra.mrb[0].mxu0 %v289
        %v355 = vpop.f32.mrb[0].mxu0
        %v356 = vadd.f32 %v227, %v355
        %v357 = vpop.f32.mrb[0].mxu0
        %v358 = vpop.f32.mrb[0].mxu0
        %v359 = vadd.f32 %v227, %v358
        %v360 = vpop.f32.mrb[0].mxu0
        %361 = vmatprep.mubr.bf16.mxu0 0
        %362 = vmatmul.mubr.bf16.gmra.mrb[0].mxu0 %v292
        %v363 = vpop.f32.mrb[0].mxu0
        %v364 = vadd.f32 %v227, %v363
        %v365 = vpop.f32.mrb[0].mxu0
        %v366 = vpop.f32.mrb[0].mxu0
        %v367 = vadd.f32 %v227, %v366
        %v368 = vpop.f32.mrb[0].mxu0
        %369 = vmatprep.mubr.bf16.mxu0 0
        %370 = vmatmul.mubr.bf16.gmra.mrb[0].mxu0 %v295
        %v371 = vpop.f32.mrb[0].mxu0
        %v372 = vadd.f32 %v227, %v371
        %v373 = vpop.f32.mrb[0].mxu0
        %v374 = vpop.f32.mrb[0].mxu0
        %v375 = vadd.f32 %v227, %v374
        %v376 = vpop.f32.mrb[0].mxu0
        %377 = vmatprep.mubr.bf16.mxu0 0
        %378 = vmatmul.mubr.bf16.gmra.mrb[0].mxu0 %v298
        %v379 = vpop.f32.mrb[0].mxu0
        %v380 = vadd.f32 %v227, %v379
        %v381 = vpop.f32.mrb[0].mxu0
        %v382 = vpop.f32.mrb[0].mxu0
        %v383 = vadd.f32 %v227, %v382
        %v384 = vpop.f32.mrb[0].mxu0
        %385 = vmatprep.mubr.bf16.mxu0 0
        %386 = vmatmul.mubr.bf16.gmra.mrb[0].mxu0 %v301
        %v387 = vpop.f32.mrb[0].mxu0
        %v388 = vadd.f32 %v227, %v387
        %v389 = vpop.f32.mrb[0].mxu0
        %v390 = vpop.f32.mrb[0].mxu0
        %v391 = vadd.f32 %v227, %v390
        %v392 = vpop.f32.mrb[0].mxu0
        %393 = vmatprep.mubr.bf16.mxu0 0
        %394 = vmatmul.mubr.bf16.gmra.mrb[0].mxu0 %v304
        %v395 = vpop.f32.mrb[0].mxu0
        %v396 = vadd.f32 %v227, %v395
        %v397 = vpop.f32.mrb[0].mxu0
        %v398 = vpop.f32.mrb[0].mxu0
        %v399 = vadd.f32 %v227, %v398
        %v400 = vpop.f32.mrb[0].mxu0
        %401 = vmatprep.mubr.bf16.mxu0 0
        %402 = vmatmul.mubr.bf16.gmra.mrb[0].mxu0 %v307
        %v403 = vpop.f32.mrb[0].mxu0
        %v404 = vadd.f32 %v227, %v403
        %v405 = vpop.f32.mrb[0].mxu0
        %v406 = vpop.f32.mrb[0].mxu0
        %v407 = vadd.f32 %v227, %v406
        %v408 = vpop.f32.mrb[0].mxu0
        %409 = vdwg.mxu0
        %v410 = vsub.f32 0.0, %v348
        %v411 = vsub.f32 0.0, %v351
        %v412 = vsub.f32 0.0, %v356
        %v413 = vsub.f32 0.0, %v359
        %v414 = vsub.f32 0.0, %v364
        %v415 = vsub.f32 0.0, %v367
        %v416 = vsub.f32 0.0, %v372
        %v417 = vsub.f32 0.0, %v375
        %v418 = vsub.f32 0.0, %v380
        %v419 = vsub.f32 0.0, %v383
        %v420 = vsub.f32 0.0, %v388
        %v421 = vsub.f32 0.0, %v391
        %v422 = vsub.f32 0.0, %v396
        %v423 = vsub.f32 0.0, %v399
        %v424 = vsub.f32 0.0, %v404
        %v425 = vsub.f32 0.0, %v407
        %v426 = vmul.f32 %v410, 1.442695
        %v427 = vpow.pop %v426
        %v428 = vmul.f32 %v411, 1.442695
        %v429 = vpow.pop %v428
        %v430 = vmul.f32 %v412, 1.442695
        %v431 = vpow.pop %v430
        %v432 = vmul.f32 %v413, 1.442695
        %v433 = vpow.pop %v432
        %v434 = vmul.f32 %v414, 1.442695
        %v435 = vpow.pop %v434
        %v436 = vmul.f32 %v415, 1.442695
        %v437 = vpow.pop %v436
        %v438 = vmul.f32 %v416, 1.442695
        %v439 = vpow.pop %v438
        %v440 = vmul.f32 %v417, 1.442695
        %v441 = vpow.pop %v440
        %v442 = vmul.f32 %v418, 1.442695
        %v443 = vpow.pop %v442
        %v444 = vmul.f32 %v419, 1.442695
        %v445 = vpow.pop %v444
        %v446 = vmul.f32 %v420, 1.442695
        %v447 = vpow.pop %v446
        %v448 = vmul.f32 %v421, 1.442695
        %v449 = vpow.pop %v448
        %v450 = vmul.f32 %v422, 1.442695
        %v451 = vpow.pop %v450
        %v452 = vmul.f32 %v423, 1.442695
        %v453 = vpow.pop %v452
        %v454 = vmul.f32 %v424, 1.442695
        %v455 = vpow.pop %v454
        %v456 = vmul.f32 %v425, 1.442695
        %v457 = vpow.pop %v456
        %v458 = vadd.f32 %v427, 1.0
        %v459 = vadd.f32 %v429, 1.0
        %v460 = vadd.f32 %v431, 1.0
        %v461 = vadd.f32 %v433, 1.0
        %v462 = vadd.f32 %v435, 1.0
        %v463 = vadd.f32 %v437, 1.0
        %v464 = vadd.f32 %v439, 1.0
        %v465 = vadd.f32 %v441, 1.0
        %v466 = vadd.f32 %v443, 1.0
        %v467 = vadd.f32 %v445, 1.0
        %v468 = vadd.f32 %v447, 1.0
        %v469 = vadd.f32 %v449, 1.0
        %v470 = vadd.f32 %v451, 1.0
        %v471 = vadd.f32 %v453, 1.0
        %v472 = vadd.f32 %v455, 1.0
        %v473 = vadd.f32 %v457, 1.0
        %v474 = vrcp.pop %v458
        %v475 = vmul.f32 1.0, %v474
        %v476 = vrcp.pop %v459
        %v477 = vmul.f32 1.0, %v476
        %v478 = vrcp.pop %v460
        %v479 = vmul.f32 1.0, %v478
        %v480 = vrcp.pop %v461
        %v481 = vmul.f32 1.0, %v480
        %v482 = vrcp.pop %v462
        %v483 = vmul.f32 1.0, %v482
        %v484 = vrcp.pop %v463
        %v485 = vmul.f32 1.0, %v484
        %v486 = vrcp.pop %v464
        %v487 = vmul.f32 1.0, %v486
        %v488 = vrcp.pop %v465
        %v489 = vmul.f32 1.0, %v488
        %v490 = vrcp.pop %v466
        %v491 = vmul.f32 1.0, %v490
        %v492 = vrcp.pop %v467
        %v493 = vmul.f32 1.0, %v492
        %v494 = vrcp.pop %v468
        %v495 = vmul.f32 1.0, %v494
        %v496 = vrcp.pop %v469
        %v497 = vmul.f32 1.0, %v496
        %v498 = vrcp.pop %v470
        %v499 = vmul.f32 1.0, %v498
        %v500 = vrcp.pop %v471
        %v501 = vmul.f32 1.0, %v500
        %v502 = vrcp.pop %v472
        %v503 = vmul.f32 1.0, %v502
        %v504 = vrcp.pop %v473
        %v505 = vmul.f32 1.0, %v504
        %v506 = vmul.f32 %v348, %v475
        %v507 = vmul.f32 %v351, %v477
        %v508 = vmul.f32 %v356, %v479
        %v509 = vmul.f32 %v359, %v481
        %v510 = vmul.f32 %v364, %v483
        %v511 = vmul.f32 %v367, %v485
        %v512 = vmul.f32 %v372, %v487
        %v513 = vmul.f32 %v375, %v489
        %v514 = vmul.f32 %v380, %v491
        %v515 = vmul.f32 %v383, %v493
        %v516 = vmul.f32 %v388, %v495
        %v517 = vmul.f32 %v391, %v497
        %v518 = vmul.f32 %v396, %v499
        %v519 = vmul.f32 %v399, %v501
        %v520 = vmul.f32 %v404, %v503
        %v521 = vmul.f32 %v407, %v505
        %522 = vst [vmem:[%s188] sm:$0xff] %v506
        %523 = vst [vmem:[%s188 + $0x8] sm:$0xff] %v507
        %524 = vst [vmem:[%s188 + $0x10] sm:$0xff] %v508
        %525 = vst [vmem:[%s188 + $0x18] sm:$0xff] %v509
        %526 = vst [vmem:[%s188 + $0x20] sm:$0xff] %v510
        %527 = vst [vmem:[%s188 + $0x28] sm:$0xff] %v511
        %528 = vst [vmem:[%s188 + $0x30] sm:$0xff] %v512
        %529 = vst [vmem:[%s188 + $0x38] sm:$0xff] %v513
        %530 = vst [vmem:[%s188 + $0x40] sm:$0xff] %v514
        %531 = vst [vmem:[%s188 + $0x48] sm:$0xff] %v515
        %532 = vst [vmem:[%s188 + $0x50] sm:$0xff] %v516
        %533 = vst [vmem:[%s188 + $0x58] sm:$0xff] %v517
        %534 = vst [vmem:[%s188 + $0x60] sm:$0xff] %v518
        %535 = vst [vmem:[%s188 + $0x68] sm:$0xff] %v519
        %536 = vst [vmem:[%s188 + $0x70] sm:$0xff] %v520
        %537 = vst [vmem:[%s188 + $0x78] sm:$0xff] %v521
        %s538 = sand.u32 %s109, 1
        %s539 = scalar_lea.sflag [#allocation3], %s538
        %s540 = sand.u32 %s109, 1
        %s541 = smul.addr %s540, 128
        %s542 = scalar_lea.vmem [#allocation2], %s541
        // Predicated region
        $region33: #{tpu_custom_call.1} parent=31 // pred_check
          %p543 = pneg %p119
        $region34: #{tpu_custom_call.1} parent=31 // pred_check_branch
          %545 = sbr.rel (%p543) target = $region36
        $region35: #{tpu_custom_call.1} parent=31 // pred_region
          %s546 = smul.u32 16, %s22
          %s548 = ssub.s32 2048, 2048
          %549 = vsyncadd %s539, %s548
          %s550 = smul.addr %s21, 32
          %s551 = sadd.s32 %s546, %s550
          %s552 = smul.addr %s551, 128
          %s553 = scalar_lea.hbm %s3, %s552
          %s554 = sshll.u32 %s542, 4
          %s555 = int_to_ptr.vmem [resolvable:$true] %s554
          %560 = dma.vmem_to_hbm [thread:$0]  %s555, 2048, %s553, %s539, 128, 128, 8
        $region36: #{tpu_custom_call.1} parent=31 // pred_fallthru
          _
      $region32: #{tpu_custom_call.1} parent=5 // pred_fallthru
        _
      %p561 = scmp.le.s32.totalorder 2, %s12
      // Predicated region
      $region37: #{tpu_custom_call.1} parent=5 // pred_check
        %p562 = pneg %p561
      $region38: #{tpu_custom_call.1} parent=5 // pred_check_branch
        %564 = sbr.rel (%p562) target = $region40
      $region39: #{tpu_custom_call.1} parent=5 // pred_region
        %s565 = ssub.s32 %s12, 2
        // Predicated region
        $region41: #{tpu_custom_call.1} parent=39 // pred_check
          %p566 = pneg %p125
        $region42: #{tpu_custom_call.1} parent=39 // pred_check_branch
          %568 = sbr.rel (%p566) target = $region44
        $region43: #{tpu_custom_call.1} parent=39 // pred_region
          %s569 = sand.u32 %s110, 1
          %s570 = scalar_lea.sflag [#allocation3], %s569
          %s571 = sand.u32 %s110, 1
          %s572 = smul.addr %s571, 128
          %s573 = scalar_lea.vmem [#allocation2], %s572
          %574 = dma.done %s570, 2048
        $region44: #{tpu_custom_call.1} parent=39 // pred_fallthru
          _
      $region40: #{tpu_custom_call.1} parent=5 // pred_fallthru
        _
    $region6: #{tpu_custom_call.1} parent=1 // loop_footer
      %s16 = sadd.s32 1, %s12
    $region7: #{tpu_custom_call.1} parent=1 // loop_footer_branch
      %11 = sbr.rel target = $region3
    $region8: #{tpu_custom_call.1} parent=1 // loop_exit
      _
    %575 = vsyncpa [#allocation3], 1
    %s576 = scalar_lea.sflag [#allocation3], 1
    %577 = vsyncpa %s576, 1

</llo_original>
